<compile_context>
chip_gen: v7x
topology: tpu7x:2x2x1
jax: 0.10.0
libtpu: 0.0.40
codegen_flags: <defaults>
</compile_context>

<pallas_src>
import jax
import jax.numpy as jnp
from jax.experimental import pallas as pl
from jax.experimental.pallas import tpu as pltpu


def _round_up(x, m):
    return (x + m - 1) // m * m


def _clinical_mlp_kernel(x_ref, w1_ref, b1_ref, w2_ref, b2_ref, out_ref):
    # Biases read once (hoisted); epilogue (bias + ReLU) in f32.
    b1 = b1_ref[...]                                   # (1, H)   f32
    b2 = b2_ref[...]                                   # (1, Op)  f32

    # h = relu(x @ W1 + b1): bf16 operands, f32 MXU accumulation.
    x_bf = x_ref[...].astype(jnp.bfloat16)
    h = jnp.dot(x_bf, w1_ref[...], preferred_element_type=jnp.float32)
    h = jnp.maximum(h + b1, 0.0)

    # y = relu(h @ W2 + b2): reference applies ReLU after fc2 as well.
    y = jnp.dot(h.astype(jnp.bfloat16), w2_ref[...],
                preferred_element_type=jnp.float32)
    y = jnp.maximum(y + b2, 0.0)

    out_ref[...] = y.astype(out_ref.dtype)


def prepare_params(params):
    """One-time conversion from PyTorch nn.Linear layout to kernel layout.

    params: fc1_w (768, D), fc1_b (768,), fc2_w (OUT, 768), fc2_b (OUT,)
    Returns dict with:
      w1 (D, 768) bf16, b1 (1, 768) f32,
      w2 (768, OUT_pad) bf16 (zero-padded), b2 (1, OUT_pad) f32, out_dim OUT.
    Call this once at load time, NOT per forward call.
    """
    fc1_w, fc1_b = params["fc1_w"], params["fc1_b"]
    fc2_w, fc2_b = params["fc2_w"], params["fc2_b"]
    H = fc1_w.shape[0]
    OUT = fc2_w.shape[0]
    OUT_pad = _round_up(OUT, 128)                      # lane-dense output store

    w1 = fc1_w.T.astype(jnp.bfloat16)                  # (D, H)
    b1 = fc1_b.reshape(1, H).astype(jnp.float32)

    w2 = fc2_w.T.astype(jnp.bfloat16)                  # (H, OUT)
    if OUT_pad != OUT:
        w2 = jnp.pad(w2, ((0, 0), (0, OUT_pad - OUT)))
        b2 = jnp.pad(fc2_b, (0, OUT_pad - OUT))
    else:
        b2 = fc2_b
    b2 = b2.reshape(1, OUT_pad).astype(jnp.float32)

    return {"w1": w1, "b1": b1, "w2": w2, "b2": b2, "out_dim": OUT}


def clinical_model_forward(x, prepared, *, drop=0.0, indenty=False):
    """Forward pass of ClinicalModel.

    x: (B, clinic_dimension) float32
    prepared: output of prepare_params (kernel-layout weights).
    `indenty` keeps the reference module's (misspelled) identity flag.
    """
    if indenty:
        return x
    if drop != 0.0:
        # TODO(synk): implement dropout masking with pltpu.prng_random_bits.
        raise NotImplementedError("dropout p>0 is not implemented in this kernel")

    B, D = x.shape
    w1, b1 = prepared["w1"], prepared["b1"]
    w2, b2 = prepared["w2"], prepared["b2"]
    H = w1.shape[1]
    OUT_pad = w2.shape[1]
    OUT = prepared["out_dim"]

    # Batch tile: whole batch when small; 256-row tiles (multiple of 8) when
    # large so x/out DMA double-buffers while weights stay resident in VMEM.
    # Sized against v7x's 64 MiB VMEM (portable to v5e/v6e's 128 MiB).
    TB = B if B <= 256 else 256
    grid = (pl.cdiv(B, TB),)

    y = pl.pallas_call(
        _clinical_mlp_kernel,
        out_shape=jax.ShapeDtypeStruct((B, OUT_pad), x.dtype),
        grid=grid,
        in_specs=[
            pl.BlockSpec((TB, D), lambda i: (i, 0)),        # x: tiled over batch
            pl.BlockSpec((D, H), lambda i: (0, 0)),          # W1: resident
            pl.BlockSpec((1, H), lambda i: (0, 0)),          # b1: resident
            pl.BlockSpec((H, OUT_pad), lambda i: (0, 0)),    # W2: resident
            pl.BlockSpec((1, OUT_pad), lambda i: (0, 0)),    # b2: resident
        ],
        out_specs=pl.BlockSpec((TB, OUT_pad), lambda i: (i, 0)),
        compiler_params=pltpu.CompilerParams(
            dimension_semantics=("parallel",),               # v7x: 2 TCs; no-op on v5e/v6e
        ),
    )(x, w1, b1, w2, b2)

    if OUT_pad != OUT:
        y = y[:, :OUT]
    return y


def init_params(key, clinic_dimension, out_dim):
    """Deterministic parameter init mirroring PyTorch nn.Linear shapes/init."""
    k1, k2, k3, k4 = jax.random.split(key, 4)
    lim1 = 1.0 / jnp.sqrt(jnp.float32(clinic_dimension))
    lim2 = 1.0 / jnp.sqrt(jnp.float32(768))
    return {
        "fc1_w": jax.random.uniform(k1, (768, clinic_dimension), jnp.float32, -lim1, lim1),
        "fc1_b": jax.random.uniform(k2, (768,), jnp.float32, -lim1, lim1),
        "fc2_w": jax.random.uniform(k3, (out_dim, 768), jnp.float32, -lim2, lim2),
        "fc2_b": jax.random.uniform(k4, (out_dim,), jnp.float32, -lim2, lim2),
    }


if __name__ == "__main__":
    key = jax.random.PRNGKey(0)
    kx, kp = jax.random.split(key)

    B = 8                   # batch
    CLINIC_DIM = 32         # clinic_dimension
    OUT = 64                # out

    x = jax.random.normal(kx, (B, CLINIC_DIM), dtype=jnp.float32)
    params = init_params(kp, CLINIC_DIM, OUT)

    # One-time weight preparation (transpose + bf16 cast + lane padding).
    prepared = prepare_params(params)

    y = clinical_model_forward(x, prepared, indenty=False)
    y = jax.block_until_ready(y)
    assert y.shape == (B, OUT)

    # Reference 1: matched-precision (bf16 operands, f32 accumulate) -> tight tol.
    w1_bf = params["fc1_w"].T.astype(jnp.bfloat16)
    w2_bf = params["fc2_w"].T.astype(jnp.bfloat16)
    h_m = jnp.maximum(
        jnp.dot(x.astype(jnp.bfloat16), w1_bf, preferred_element_type=jnp.float32)
        + params["fc1_b"], 0.0)
    y_m = jnp.maximum(
        jnp.dot(h_m.astype(jnp.bfloat16), w2_bf, preferred_element_type=jnp.float32)
        + params["fc2_b"], 0.0)
    assert jnp.allclose(y, y_m, atol=2e-3, rtol=2e-3)

    # Reference 2: full f32 PyTorch-equivalent math -> loose tol (bf16 operands).
    h_ref = jnp.maximum(x @ params["fc1_w"].T + params["fc1_b"], 0.0)
    y_ref = jnp.maximum(h_ref @ params["fc2_w"].T + params["fc2_b"], 0.0)
    assert jnp.allclose(y, y_ref, atol=5e-2, rtol=5e-2)

    # Identity path.
    assert jnp.array_equal(clinical_model_forward(x, prepared, indenty=True), x)

    print("KERNEL_OK")
</pallas_src>

<mosaic_0001>
module attributes {stable_mosaic.version = 11 : i64} {
  func.func @_clinical_mlp_kernel(%arg0: i32, %arg1: memref<8x32xf32, #tpu.memory_space<vmem>>, %arg2: memref<32x768xbf16, #tpu.memory_space<vmem>>, %arg3: memref<1x768xf32, #tpu.memory_space<vmem>>, %arg4: memref<768x128xbf16, #tpu.memory_space<vmem>>, %arg5: memref<1x128xf32, #tpu.memory_space<vmem>>, %arg6: memref<8x128xf32, #tpu.memory_space<vmem>>) attributes {dimension_semantics = [#tpu.dimension_semantics<parallel>], iteration_bounds = array<i64: 1>, scalar_prefetch = 0 : i64, scratch_operands = 0 : i64, tpu.core_type = #tpu.core_type<tc>, window_params = [{transform_indices = @transform_0, window_bounds = array<i64: 8, 32>}, {pipeline_mode = #tpu.pipeline_mode<synchronous>, transform_indices = @transform_1, window_bounds = array<i64: 32, 768>}, {pipeline_mode = #tpu.pipeline_mode<synchronous>, transform_indices = @transform_2, window_bounds = array<i64: 1, 768>}, {pipeline_mode = #tpu.pipeline_mode<synchronous>, transform_indices = @transform_3, window_bounds = array<i64: 768, 128>}, {pipeline_mode = #tpu.pipeline_mode<synchronous>, transform_indices = @transform_4, window_bounds = array<i64: 1, 128>}, {transform_indices = @transform_5, window_bounds = array<i64: 8, 128>}]} {
    %c0 = arith.constant 0 : index
    %c0_0 = arith.constant 0 : index
    %0 = vector.load %arg3[%c0, %c0_0] : memref<1x768xf32, #tpu.memory_space<vmem>>, vector<1x768xf32>
    %c0_1 = arith.constant 0 : index
    %c0_2 = arith.constant 0 : index
    %1 = vector.load %arg5[%c0_1, %c0_2] : memref<1x128xf32, #tpu.memory_space<vmem>>, vector<1x128xf32>
    %c0_3 = arith.constant 0 : index
    %c0_4 = arith.constant 0 : index
    %2 = vector.load %arg1[%c0_3, %c0_4] : memref<8x32xf32, #tpu.memory_space<vmem>>, vector<8x32xf32>
    %3 = arith.truncf %2 : vector<8x32xf32> to vector<8x32xbf16>
    %c0_5 = arith.constant 0 : index
    %c0_6 = arith.constant 0 : index
    %4 = vector.load %arg2[%c0_5, %c0_6] : memref<32x768xbf16, #tpu.memory_space<vmem>>, vector<32x768xbf16>
    %cst = arith.constant dense<0.000000e+00> : vector<8x768xf32>
    %5 = tpu.matmul %3, %4, %cst {dimension_numbers = #tpu.dot_dimension_numbers<[1], [0], [0], [1], [0, 0, 1, 1], [], []>} : vector<8x32xbf16>, vector<32x768xbf16>, vector<8x768xf32> -> vector<8x768xf32>
    %6 = vector.broadcast %0 : vector<1x768xf32> to vector<8x768xf32>
    %7 = arith.addf %5, %6 : vector<8x768xf32>
    %cst_7 = arith.constant 0.000000e+00 : f32
    %8 = vector.broadcast %cst_7 : f32 to vector<8x768xf32>
    %9 = arith.maximumf %7, %8 : vector<8x768xf32>
    %10 = arith.truncf %9 : vector<8x768xf32> to vector<8x768xbf16>
    %c0_8 = arith.constant 0 : index
    %c0_9 = arith.constant 0 : index
    %11 = vector.load %arg4[%c0_8, %c0_9] : memref<768x128xbf16, #tpu.memory_space<vmem>>, vector<768x128xbf16>
    %cst_10 = arith.constant dense<0.000000e+00> : vector<8x128xf32>
    %12 = tpu.matmul %10, %11, %cst_10 {dimension_numbers = #tpu.dot_dimension_numbers<[1], [0], [0], [1], [0, 0, 1, 1], [], []>} : vector<8x768xbf16>, vector<768x128xbf16>, vector<8x128xf32> -> vector<8x128xf32>
    %13 = vector.broadcast %1 : vector<1x128xf32> to vector<8x128xf32>
    %14 = arith.addf %12, %13 : vector<8x128xf32>
    %cst_11 = arith.constant 0.000000e+00 : f32
    %15 = vector.broadcast %cst_11 : f32 to vector<8x128xf32>
    %16 = arith.maximumf %14, %15 : vector<8x128xf32>
    %c0_12 = arith.constant 0 : index
    %c0_13 = arith.constant 0 : index
    %17 = vector.load %arg6[%c0_12, %c0_13] : memref<8x128xf32, #tpu.memory_space<vmem>>, vector<8x128xf32>
    tpu.vector_store %arg6[%c0_12, %c0_13], %16 {strides = array<i32>} : memref<8x128xf32, #tpu.memory_space<vmem>>, vector<8x128xf32>,
    return
  }
  func.func @transform_0(%arg0: i32) -> (i32, i32) {
    %c0_i32 = arith.constant 0 : i32
    %c0_i32_0 = arith.constant 0 : i32
    return %arg0, %c0_i32 : i32, i32
  }
  func.func @transform_1(%arg0: i32) -> (i32, i32) {
    %c0_i32 = arith.constant 0 : i32
    %c0_i32_0 = arith.constant 0 : i32
    %c0_i32_1 = arith.constant 0 : i32
    return %c0_i32, %c0_i32_0 : i32, i32
  }
  func.func @transform_2(%arg0: i32) -> (i32, i32) {
    %c0_i32 = arith.constant 0 : i32
    %c0_i32_0 = arith.constant 0 : i32
    %c0_i32_1 = arith.constant 0 : i32
    return %c0_i32, %c0_i32_0 : i32, i32
  }
  func.func @transform_3(%arg0: i32) -> (i32, i32) {
    %c0_i32 = arith.constant 0 : i32
    %c0_i32_0 = arith.constant 0 : i32
    %c0_i32_1 = arith.constant 0 : i32
    return %c0_i32, %c0_i32_0 : i32, i32
  }
  func.func @transform_4(%arg0: i32) -> (i32, i32) {
    %c0_i32 = arith.constant 0 : i32
    %c0_i32_0 = arith.constant 0 : i32
    %c0_i32_1 = arith.constant 0 : i32
    return %c0_i32, %c0_i32_0 : i32, i32
  }
  func.func @transform_5(%arg0: i32) -> (i32, i32) {
    %c0_i32 = arith.constant 0 : i32
    %c0_i32_0 = arith.constant 0 : i32
    return %arg0, %c0_i32 : i32, i32
  }
}

</mosaic_0001>

<llo_original>
// kernel: tpu_custom_call.1
$region0: #{tpu_custom_call.1}
  #allocation0 [shape = 'u32[]', space=smem, size = 0x4, offset = 0x4, fixed_abs, tag = 'smem constant byte address 0x4 - core index']
  #allocation1 [shape = 'u32[144,128]{1,0:T(1,128)}', space=vmem, size = 0x12000, scoped, tag = 'internal scratch']
  %s0 = inlined_call_operand.hbm [shape: f32[8,32], index: 0, kind: input, shape index: {}]
  %s1 = inlined_call_operand.hbm [shape: bf16[32,768], index: 1, kind: input, shape index: {}]
  %s2 = inlined_call_operand.vmem [shape: f32[1,768], index: 2, kind: input, shape index: {}]
  %s3 = inlined_call_operand.hbm [shape: bf16[768,128], index: 3, kind: input, shape index: {}]
  %s4 = inlined_call_operand.vmem [shape: f32[1,128], index: 4, kind: input, shape index: {}]
  %s5 = inlined_call_operand.hbm [shape: f32[8,128], index: 5, kind: output, shape index: {}]
  %s6 = sld [smem:[#allocation0]]
  $region42: #{tpu_custom_call.1} parent=0
    _
  %s8 = ssub.s32 1, %s6
  %s9 = scalar_select 0, %s8, %s6
  $region1: #{tpu_custom_call.1} parent=0
    #allocation2 [shape = 'u8[4096]{0}', space=vmem, size = 0x1000, scoped, tag = 'input window, operand 0, single buffered']
    #allocation3 [shape = 's32[1]{0}', space=sflag, size = 0x4, scoped, tag = 'scoped memory for tpu_custom_call.1']
    #allocation4 [shape = 's32[1]{0}', space=sflag, size = 0x4, scoped, tag = 'scoped memory for tpu_custom_call.1']
    #allocation5 [shape = 'u8[49152]{0}', space=vmem, size = 0xc000, scoped, tag = 'input window, operand 1, single buffered']
    #allocation6 [shape = 's32[1]{0}', space=sflag, size = 0x4, scoped, tag = 'scoped memory for tpu_custom_call.1']
    #allocation7 [shape = 'u8[196608]{0}', space=vmem, size = 0x30000, scoped, tag = 'input window, operand 3, single buffered']
    #allocation8 [shape = 'u8[4096]{0}', space=vmem, size = 0x1000, scoped, tag = 'output window, operand 0, single buffered']
    %10 = vsyncpa [#allocation3], 0
    %11 = vsyncpa [#allocation6], 0
    %12 = vsyncpa [#allocation4], 0
    // Predicated region
    $region2: #{tpu_custom_call.1} parent=1 // pred_check
      _
    $region3: #{tpu_custom_call.1} parent=1 // pred_check_branch
      %14 = sbr.rel (0) target = $region5
    $region4: #{tpu_custom_call.1} parent=1 // pred_region
      %s16 = ssub.s32 128, 128
      %17 = vsyncadd [#allocation3], %s16
      %s19 = sshll.u32 [#allocation2], 4
      %s20 = int_to_ptr.vmem [resolvable:$true] %s19
      %22 = dma.hbm_to_vmem [thread:$0]  %s0, 128, %s20, [#allocation3]
    $region5: #{tpu_custom_call.1} parent=1 // pred_fallthru
      _
    // Predicated region
    $region6: #{tpu_custom_call.1} parent=1 // pred_check
      _
    $region7: #{tpu_custom_call.1} parent=1 // pred_check_branch
      %24 = sbr.rel (0) target = $region9
    $region8: #{tpu_custom_call.1} parent=1 // pred_region
      %s26 = ssub.s32 1536, 1536
      %27 = vsyncadd [#allocation6], %s26
      %s28 = sshll.u32 [#allocation5], 4
      %s29 = int_to_ptr.vmem [resolvable:$true] %s28
      %34 = dma.hbm_to_vmem [thread:$0]  %s1, 1536, %s29, [#allocation6], 384, 384, 24
    $region9: #{tpu_custom_call.1} parent=1 // pred_fallthru
      _
    // Predicated region
    $region10: #{tpu_custom_call.1} parent=1 // pred_check
      _
    $region11: #{tpu_custom_call.1} parent=1 // pred_check_branch
      %36 = sbr.rel (0) target = $region13
    $region12: #{tpu_custom_call.1} parent=1 // pred_region
      _
    $region13: #{tpu_custom_call.1} parent=1 // pred_fallthru
      _
    // Predicated region
    $region14: #{tpu_custom_call.1} parent=1 // pred_check
      _
    $region15: #{tpu_custom_call.1} parent=1 // pred_check_branch
      %38 = sbr.rel (0) target = $region17
    $region16: #{tpu_custom_call.1} parent=1 // pred_region
      %s40 = ssub.s32 6144, 6144
      %41 = vsyncadd [#allocation6], %s40
      %s42 = sshll.u32 [#allocation7], 4
      %s43 = int_to_ptr.vmem [resolvable:$true] %s42
      %48 = dma.hbm_to_vmem [thread:$0]  %s3, 6144, %s43, [#allocation6], 64, 64, 4
    $region17: #{tpu_custom_call.1} parent=1 // pred_fallthru
      _
    // Predicated region
    $region18: #{tpu_custom_call.1} parent=1 // pred_check
      _
    $region19: #{tpu_custom_call.1} parent=1 // pred_check_branch
      %50 = sbr.rel (0) target = $region21
    $region20: #{tpu_custom_call.1} parent=1 // pred_region
      _
    $region21: #{tpu_custom_call.1} parent=1 // pred_fallthru
      _
    // Predicated region
    $region22: #{tpu_custom_call.1} parent=1 // pred_check
      _
    $region23: #{tpu_custom_call.1} parent=1 // pred_check_branch
      %52 = sbr.rel (0) target = $region25
    $region24: #{tpu_custom_call.1} parent=1 // pred_region
      %53 = dma.done [#allocation3], 128
    $region25: #{tpu_custom_call.1} parent=1 // pred_fallthru
      _
    // Predicated region
    $region26: #{tpu_custom_call.1} parent=1 // pred_check
      _
    $region27: #{tpu_custom_call.1} parent=1 // pred_check_branch
      %55 = sbr.rel (0) target = $region29
    $region28: #{tpu_custom_call.1} parent=1 // pred_region
      %56 = dma.done [#allocation6], 1536
    $region29: #{tpu_custom_call.1} parent=1 // pred_fallthru
      _
    // Predicated region
    $region30: #{tpu_custom_call.1} parent=1 // pred_check
      _
    $region31: #{tpu_custom_call.1} parent=1 // pred_check_branch
      %58 = sbr.rel (0) target = $region33
    $region32: #{tpu_custom_call.1} parent=1 // pred_region
      %59 = dma.done [#allocation6], 6144
    $region33: #{tpu_custom_call.1} parent=1 // pred_fallthru
      _
    %v61 = vld [vmem:[%s2] sm:$0x3f]
    %v62 = vld [vmem:[%s4] sm:$0x1]
    %v63 = vld [vmem:[#allocation2] sm:$0xff]
    %v64 = vpack.c.bf16 %v63, %v63
    %v65 = vld [vmem:[#allocation5] sm:$0xff]
    %v66 = vld [vmem:[#allocation5 + $0x8] sm:$0xff]
    %v67 = vld [vmem:[#allocation5 + $0x10] sm:$0xff]
    %v68 = vld [vmem:[#allocation5 + $0x18] sm:$0xff]
    %v69 = vld [vmem:[#allocation5 + $0x20] sm:$0xff]
    %v70 = vld [vmem:[#allocation5 + $0x28] sm:$0xff]
    %v71 = vld [vmem:[#allocation5 + $0x30] sm:$0xff]
    %v72 = vld [vmem:[#allocation5 + $0x38] sm:$0xff]
    %v73 = vld [vmem:[#allocation5 + $0x40] sm:$0xff]
    %v74 = vld [vmem:[#allocation5 + $0x48] sm:$0xff]
    %v75 = vld [vmem:[#allocation5 + $0x50] sm:$0xff]
    %v76 = vld [vmem:[#allocation5 + $0x58] sm:$0xff]
    %v78 = vlaneseq
    %v79 = vshrl.u32 %v78, 7
    %v80 = vsub.s32 0, %v79
    %v81 = vrot.slane %v61, %v80
    %v82 = vlaneseq
    %v83 = vshrl.u32 %v82, 7
    %v84 = vsub.s32 1, %v83
    %v85 = vrot.slane %v61, %v84
    %v86 = vlaneseq
    %v87 = vshrl.u32 %v86, 7
    %v88 = vsub.s32 2, %v87
    %v89 = vrot.slane %v61, %v88
    %v90 = vlaneseq
    %v91 = vshrl.u32 %v90, 7
    %v92 = vsub.s32 3, %v91
    %v93 = vrot.slane %v61, %v92
    %v94 = vlaneseq
    %v95 = vshrl.u32 %v94, 7
    %v96 = vsub.s32 4, %v95
    %v97 = vrot.slane %v61, %v96
    %v98 = vlaneseq
    %v99 = vshrl.u32 %v98, 7
    %v100 = vsub.s32 5, %v99
    %v101 = vrot.slane %v61, %v100
    %v120 = vunpack.c.l.b16 %v65
    %v121 = vunpack.c.h.b16 %v65
    %v122 = vunpack.c.l.b16 %v66
    %v123 = vunpack.c.h.b16 %v66
    %v124 = vunpack.c.l.b16 %v67
    %v125 = vunpack.c.h.b16 %v67
    %v126 = vunpack.c.l.b16 %v68
    %v127 = vunpack.c.h.b16 %v68
    %v128 = vunpack.c.l.b16 %v69
    %v129 = vunpack.c.h.b16 %v69
    %v130 = vunpack.c.l.b16 %v70
    %v131 = vunpack.c.h.b16 %v70
    %v132 = vunpack.c.l.b16 %v71
    %v133 = vunpack.c.h.b16 %v71
    %v134 = vunpack.c.l.b16 %v72
    %v135 = vunpack.c.h.b16 %v72
    %v136 = vunpack.c.l.b16 %v73
    %v137 = vunpack.c.h.b16 %v73
    %v138 = vunpack.c.l.b16 %v74
    %v139 = vunpack.c.h.b16 %v74
    %v140 = vunpack.c.l.b16 %v75
    %v141 = vunpack.c.h.b16 %v75
    %v142 = vunpack.c.l.b16 %v76
    %v143 = vunpack.c.h.b16 %v76
    %v144 = vpack.c.b16 %v126, %v120
    %v145 = vpack.c.b16 %v127, %v121
    %v146 = vpack.c.b16 %v128, %v122
    %v147 = vpack.c.b16 %v129, %v123
    %v148 = vpack.c.b16 %v130, %v124
    %v149 = vpack.c.b16 %v131, %v125
    %v150 = vpack.c.b16 %v138, %v132
    %v151 = vpack.c.b16 %v139, %v133
    %v152 = vpack.c.b16 %v140, %v134
    %v153 = vpack.c.b16 %v141, %v135
    %v154 = vpack.c.b16 %v142, %v136
    %v155 = vpack.c.b16 %v143, %v137
    %vm168 = vcmask 261120
    %v170 = vsel %vm168, %v64, 0
    %172 = vmatprep.subr.bf16.mxu0 %v145
    %173 = vmatpush1.bf16.msra.mxu0 %v144
    %174 = vmatprep.subr.bf16.mxu0 %v151
    %175 = vmatpush1.bf16.msra.mxu0 %v150
    %176 = vmatprep.subr.bf16.mxu0 0
    %177 = vmatpush1.bf16.msra.mxu0 0
    %178 = vmatprep.subr.bf16.mxu0 0
    %179 = vmatpush1.bf16.msra.mxu0 0
    %180 = vmatprep.subr.bf16.mxu0 0
    %181 = vmatpush1.bf16.msra.mxu0 0
    %182 = vmatprep.subr.bf16.mxu0 0
    %183 = vmatpush1.bf16.msra.mxu0 0
    %184 = vmatprep.subr.bf16.mxu0 0
    %185 = vmatpush1.bf16.msra.mxu0 0
    %186 = vmatprep.subr.bf16.mxu0 0
    %187 = vmatpush1.bf16.msra.mxu0 0
    %188 = vmatprep.subr.bf16.mxu0 0
    %189 = vmatpush1.bf16.msra.mxu0 0
    %190 = vmatprep.subr.bf16.mxu0 0
    %191 = vmatpush1.bf16.msra.mxu0 0
    %192 = vmatprep.subr.bf16.mxu0 0
    %193 = vmatpush1.bf16.msra.mxu0 0
    %194 = vmatprep.subr.bf16.mxu0 0
    %195 = vmatpush1.bf16.msra.mxu0 0
    %196 = vmatprep.subr.bf16.mxu0 0
    %197 = vmatpush1.bf16.msra.mxu0 0
    %198 = vmatprep.subr.bf16.mxu0 0
    %199 = vmatpush1.bf16.msra.mxu0 0
    %200 = vmatprep.subr.bf16.mxu0 0
    %201 = vmatpush1.bf16.msra.mxu0 0
    %202 = vmatprep.subr.bf16.mxu0 0
    %203 = vmatpush1.bf16.msra.mxu0 0
    %204 = vmatprep.mubr.bf16.mxu0 0
    %205 = vmatmul.mubr.bf16.gmra.mrb[0].mxu0 %v170
    %v206 = vpop.f32.mrb[0].mxu0
    %v207 = vadd.f32 %v81, %v206
    %v208 = vpop.f32.mrb[0].mxu0
    %v209 = vadd.f32 %v85, %v208
    %v210 = vpop.f32.mrb[0].mxu0
    %v211 = vpop.f32.mrb[0].mxu0
    %212 = vdwg.mxu0
    %213 = vmatprep.subr.bf16.mxu0 %v147
    %214 = vmatpush1.bf16.msra.mxu0 %v146
    %215 = vmatprep.subr.bf16.mxu0 %v153
    %216 = vmatpush1.bf16.msra.mxu0 %v152
    %217 = vmatprep.subr.bf16.mxu0 0
    %218 = vmatpush1.bf16.msra.mxu0 0
    %219 = vmatprep.subr.bf16.mxu0 0
    %220 = vmatpush1.bf16.msra.mxu0 0
    %221 = vmatprep.subr.bf16.mxu0 0
    %222 = vmatpush1.bf16.msra.mxu0 0
    %223 = vmatprep.subr.bf16.mxu0 0
    %224 = vmatpush1.bf16.msra.mxu0 0
    %225 = vmatprep.subr.bf16.mxu0 0
    %226 = vmatpush1.bf16.msra.mxu0 0
    %227 = vmatprep.subr.bf16.mxu0 0
    %228 = vmatpush1.bf16.msra.mxu0 0
    %229 = vmatprep.subr.bf16.mxu0 0
    %230 = vmatpush1.bf16.msra.mxu0 0
    %231 = vmatprep.subr.bf16.mxu0 0
    %232 = vmatpush1.bf16.msra.mxu0 0
    %233 = vmatprep.subr.bf16.mxu0 0
    %234 = vmatpush1.bf16.msra.mxu0 0
    %235 = vmatprep.subr.bf16.mxu0 0
    %236 = vmatpush1.bf16.msra.mxu0 0
    %237 = vmatprep.subr.bf16.mxu0 0
    %238 = vmatpush1.bf16.msra.mxu0 0
    %239 = vmatprep.subr.bf16.mxu0 0
    %240 = vmatpush1.bf16.msra.mxu0 0
    %241 = vmatprep.subr.bf16.mxu0 0
    %242 = vmatpush1.bf16.msra.mxu0 0
    %243 = vmatprep.subr.bf16.mxu0 0
    %244 = vmatpush1.bf16.msra.mxu0 0
    %245 = vmatprep.mubr.bf16.mxu0 0
    %246 = vmatmul.mubr.bf16.gmra.mrb[0].mxu0 %v170
    %v247 = vpop.f32.mrb[0].mxu0
    %v248 = vadd.f32 %v89, %v247
    %v249 = vpop.f32.mrb[0].mxu0
    %v250 = vadd.f32 %v93, %v249
    %v251 = vpop.f32.mrb[0].mxu0
    %v252 = vpop.f32.mrb[0].mxu0
    %253 = vdwg.mxu0
    %254 = vmatprep.subr.bf16.mxu0 %v149
    %255 = vmatpush1.bf16.msra.mxu0 %v148
    %256 = vmatprep.subr.bf16.mxu0 %v155
    %257 = vmatpush1.bf16.msra.mxu0 %v154
    %258 = vmatprep.subr.bf16.mxu0 0
    %259 = vmatpush1.bf16.msra.mxu0 0
    %260 = vmatprep.subr.bf16.mxu0 0
    %261 = vmatpush1.bf16.msra.mxu0 0
    %262 = vmatprep.subr.bf16.mxu0 0
    %263 = vmatpush1.bf16.msra.mxu0 0
    %264 = vmatprep.subr.bf16.mxu0 0
    %265 = vmatpush1.bf16.msra.mxu0 0
    %266 = vmatprep.subr.bf16.mxu0 0
    %267 = vmatpush1.bf16.msra.mxu0 0
    %268 = vmatprep.subr.bf16.mxu0 0
    %269 = vmatpush1.bf16.msra.mxu0 0
    %270 = vmatprep.subr.bf16.mxu0 0
    %271 = vmatpush1.bf16.msra.mxu0 0
    %272 = vmatprep.subr.bf16.mxu0 0
    %273 = vmatpush1.bf16.msra.mxu0 0
    %274 = vmatprep.subr.bf16.mxu0 0
    %275 = vmatpush1.bf16.msra.mxu0 0
    %276 = vmatprep.subr.bf16.mxu0 0
    %277 = vmatpush1.bf16.msra.mxu0 0
    %278 = vmatprep.subr.bf16.mxu0 0
    %279 = vmatpush1.bf16.msra.mxu0 0
    %280 = vmatprep.subr.bf16.mxu0 0
    %281 = vmatpush1.bf16.msra.mxu0 0
    %282 = vmatprep.subr.bf16.mxu0 0
    %283 = vmatpush1.bf16.msra.mxu0 0
    %284 = vmatprep.subr.bf16.mxu0 0
    %285 = vmatpush1.bf16.msra.mxu0 0
    %286 = vmatprep.mubr.bf16.mxu0 0
    %287 = vmatmul.mubr.bf16.gmra.mrb[0].mxu0 %v170
    %v288 = vpop.f32.mrb[0].mxu0
    %v289 = vadd.f32 %v97, %v288
    %v290 = vpop.f32.mrb[0].mxu0
    %v291 = vadd.f32 %v101, %v290
    %v292 = vpop.f32.mrb[0].mxu0
    %v293 = vpop.f32.mrb[0].mxu0
    %294 = vdwg.mxu0
    %v295 = vmax.f32 %v207, 0.0
    %v296 = vmax.f32 %v209, 0.0
    %v297 = vmax.f32 %v248, 0.0
    %v298 = vmax.f32 %v250, 0.0
    %v299 = vmax.f32 %v289, 0.0
    %v300 = vmax.f32 %v291, 0.0
    %v301 = vpack.c.bf16 %v295, %v295
    %v302 = vpack.c.bf16 %v296, %v296
    %v303 = vpack.c.bf16 %v297, %v297
    %v304 = vpack.c.bf16 %v298, %v298
    %v305 = vpack.c.bf16 %v299, %v299
    %v306 = vpack.c.bf16 %v300, %v300
    %v307 = vld [vmem:[#allocation7] sm:$0xf]
    %v308 = vld [vmem:[#allocation7 + $0x4] sm:$0xf]
    %v309 = vld [vmem:[#allocation7 + $0x8] sm:$0xf]
    %v310 = vld [vmem:[#allocation7 + $0xc] sm:$0xf]
    %v311 = vld [vmem:[#allocation7 + $0x10] sm:$0xf]
    %v312 = vld [vmem:[#allocation7 + $0x14] sm:$0xf]
    %v313 = vld [vmem:[#allocation7 + $0x18] sm:$0xf]
    %v314 = vld [vmem:[#allocation7 + $0x1c] sm:$0xf]
    %v315 = vld [vmem:[#allocation7 + $0x20] sm:$0xf]
    %v316 = vld [vmem:[#allocation7 + $0x24] sm:$0xf]
    %v317 = vld [vmem:[#allocation7 + $0x28] sm:$0xf]
    %v318 = vld [vmem:[#allocation7 + $0x2c] sm:$0xf]
    %v319 = vld [vmem:[#allocation7 + $0x30] sm:$0xf]
    %v320 = vld [vmem:[#allocation7 + $0x34] sm:$0xf]
    %v321 = vld [vmem:[#allocation7 + $0x38] sm:$0xf]
    %v322 = vld [vmem:[#allocation7 + $0x3c] sm:$0xf]
    %v323 = vld [vmem:[#allocation7 + $0x40] sm:$0xf]
    %v324 = vld [vmem:[#allocation7 + $0x44] sm:$0xf]
    %v325 = vld [vmem:[#allocation7 + $0x48] sm:$0xf]
    %v326 = vld [vmem:[#allocation7 + $0x4c] sm:$0xf]
    %v327 = vld [vmem:[#allocation7 + $0x50] sm:$0xf]
    %v328 = vld [vmem:[#allocation7 + $0x54] sm:$0xf]
    %v329 = vld [vmem:[#allocation7 + $0x58] sm:$0xf]
    %v330 = vld [vmem:[#allocation7 + $0x5c] sm:$0xf]
    %v331 = vld [vmem:[#allocation7 + $0x60] sm:$0xf]
    %v332 = vld [vmem:[#allocation7 + $0x64] sm:$0xf]
    %v333 = vld [vmem:[#allocation7 + $0x68] sm:$0xf]
    %v334 = vld [vmem:[#allocation7 + $0x6c] sm:$0xf]
    %v335 = vld [vmem:[#allocation7 + $0x70] sm:$0xf]
    %v336 = vld [vmem:[#allocation7 + $0x74] sm:$0xf]
    %v337 = vld [vmem:[#allocation7 + $0x78] sm:$0xf]
    %v338 = vld [vmem:[#allocation7 + $0x7c] sm:$0xf]
    %v339 = vld [vmem:[#allocation7 + $0x80] sm:$0xf]
    %v340 = vld [vmem:[#allocation7 + $0x84] sm:$0xf]
    %v341 = vld [vmem:[#allocation7 + $0x88] sm:$0xf]
    %v342 = vld [vmem:[#allocation7 + $0x8c] sm:$0xf]
    %v343 = vld [vmem:[#allocation7 + $0x90] sm:$0xf]
    %v344 = vld [vmem:[#allocation7 + $0x94] sm:$0xf]
    %v345 = vld [vmem:[#allocation7 + $0x98] sm:$0xf]
    %v346 = vld [vmem:[#allocation7 + $0x9c] sm:$0xf]
    %v347 = vld [vmem:[#allocation7 + $0xa0] sm:$0xf]
    %v348 = vld [vmem:[#allocation7 + $0xa4] sm:$0xf]
    %v349 = vld [vmem:[#allocation7 + $0xa8] sm:$0xf]
    %v350 = vld [vmem:[#allocation7 + $0xac] sm:$0xf]
    %v351 = vld [vmem:[#allocation7 + $0xb0] sm:$0xf]
    %v352 = vld [vmem:[#allocation7 + $0xb4] sm:$0xf]
    %v353 = vld [vmem:[#allocation7 + $0xb8] sm:$0xf]
    %v354 = vld [vmem:[#allocation7 + $0xbc] sm:$0xf]
    %v355 = vld [vmem:[#allocation7 + $0xc0] sm:$0xf]
    %v356 = vld [vmem:[#allocation7 + $0xc4] sm:$0xf]
    %v357 = vld [vmem:[#allocation7 + $0xc8] sm:$0xf]
    %v358 = vld [vmem:[#allocation7 + $0xcc] sm:$0xf]
    %v359 = vld [vmem:[#allocation7 + $0xd0] sm:$0xf]
    %v360 = vld [vmem:[#allocation7 + $0xd4] sm:$0xf]
    %v361 = vld [vmem:[#allocation7 + $0xd8] sm:$0xf]
    %v362 = vld [vmem:[#allocation7 + $0xdc] sm:$0xf]
    %v363 = vld [vmem:[#allocation7 + $0xe0] sm:$0xf]
    %v364 = vld [vmem:[#allocation7 + $0xe4] sm:$0xf]
    %v365 = vld [vmem:[#allocation7 + $0xe8] sm:$0xf]
    %v366 = vld [vmem:[#allocation7 + $0xec] sm:$0xf]
    %v367 = vld [vmem:[#allocation7 + $0xf0] sm:$0xf]
    %v368 = vld [vmem:[#allocation7 + $0xf4] sm:$0xf]
    %v369 = vld [vmem:[#allocation7 + $0xf8] sm:$0xf]
    %v370 = vld [vmem:[#allocation7 + $0xfc] sm:$0xf]
    %v371 = vld [vmem:[#allocation7 + $0x100] sm:$0xf]
    %v372 = vld [vmem:[#allocation7 + $0x104] sm:$0xf]
    %v373 = vld [vmem:[#allocation7 + $0x108] sm:$0xf]
    %v374 = vld [vmem:[#allocation7 + $0x10c] sm:$0xf]
    %v375 = vld [vmem:[#allocation7 + $0x110] sm:$0xf]
    %v376 = vld [vmem:[#allocation7 + $0x114] sm:$0xf]
    %v377 = vld [vmem:[#allocation7 + $0x118] sm:$0xf]
    %v378 = vld [vmem:[#allocation7 + $0x11c] sm:$0xf]
    %v379 = vld [vmem:[#allocation7 + $0x120] sm:$0xf]
    %v380 = vld [vmem:[#allocation7 + $0x124] sm:$0xf]
    %v381 = vld [vmem:[#allocation7 + $0x128] sm:$0xf]
    %v382 = vld [vmem:[#allocation7 + $0x12c] sm:$0xf]
    %v383 = vld [vmem:[#allocation7 + $0x130] sm:$0xf]
    %v384 = vld [vmem:[#allocation7 + $0x134] sm:$0xf]
    %v385 = vld [vmem:[#allocation7 + $0x138] sm:$0xf]
    %v386 = vld [vmem:[#allocation7 + $0x13c] sm:$0xf]
    %v387 = vld [vmem:[#allocation7 + $0x140] sm:$0xf]
    %v388 = vld [vmem:[#allocation7 + $0x144] sm:$0xf]
    %v389 = vld [vmem:[#allocation7 + $0x148] sm:$0xf]
    %v390 = vld [vmem:[#allocation7 + $0x14c] sm:$0xf]
    %v391 = vld [vmem:[#allocation7 + $0x150] sm:$0xf]
    %v392 = vld [vmem:[#allocation7 + $0x154] sm:$0xf]
    %v393 = vld [vmem:[#allocation7 + $0x158] sm:$0xf]
    %v394 = vld [vmem:[#allocation7 + $0x15c] sm:$0xf]
    %v395 = vld [vmem:[#allocation7 + $0x160] sm:$0xf]
    %v396 = vld [vmem:[#allocation7 + $0x164] sm:$0xf]
    %v397 = vld [vmem:[#allocation7 + $0x168] sm:$0xf]
    %v398 = vld [vmem:[#allocation7 + $0x16c] sm:$0xf]
    %v399 = vld [vmem:[#allocation7 + $0x170] sm:$0xf]
    %v400 = vld [vmem:[#allocation7 + $0x174] sm:$0xf]
    %v401 = vld [vmem:[#allocation7 + $0x178] sm:$0xf]
    %v402 = vld [vmem:[#allocation7 + $0x17c] sm:$0xf]
    %v404 = vlaneseq
    %v405 = vshrl.u32 %v404, 7
    %v406 = vsub.s32 0, %v405
    %v407 = vrot.slane %v62, %v406
    %v505 = vunpack.c.l.b16 %v307
    %v506 = vunpack.c.l.b16 %v308
    %v507 = vunpack.c.l.b16 %v309
    %v508 = vunpack.c.l.b16 %v310
    %v509 = vunpack.c.l.b16 %v311
    %v510 = vunpack.c.l.b16 %v312
    %v511 = vunpack.c.l.b16 %v313
    %v512 = vunpack.c.l.b16 %v314
    %v513 = vunpack.c.l.b16 %v315
    %v514 = vunpack.c.l.b16 %v316
    %v515 = vunpack.c.l.b16 %v317
    %v516 = vunpack.c.l.b16 %v318
    %v517 = vunpack.c.l.b16 %v319
    %v518 = vunpack.c.l.b16 %v320
    %v519 = vunpack.c.l.b16 %v321
    %v520 = vunpack.c.l.b16 %v322
    %v521 = vunpack.c.l.b16 %v323
    %v522 = vunpack.c.l.b16 %v324
    %v523 = vunpack.c.l.b16 %v325
    %v524 = vunpack.c.l.b16 %v326
    %v525 = vunpack.c.l.b16 %v327
    %v526 = vunpack.c.l.b16 %v328
    %v527 = vunpack.c.l.b16 %v329
    %v528 = vunpack.c.l.b16 %v330
    %v529 = vunpack.c.l.b16 %v331
    %v530 = vunpack.c.l.b16 %v332
    %v531 = vunpack.c.l.b16 %v333
    %v532 = vunpack.c.l.b16 %v334
    %v533 = vunpack.c.l.b16 %v335
    %v534 = vunpack.c.l.b16 %v336
    %v535 = vunpack.c.l.b16 %v337
    %v536 = vunpack.c.l.b16 %v338
    %v537 = vunpack.c.l.b16 %v339
    %v538 = vunpack.c.l.b16 %v340
    %v539 = vunpack.c.l.b16 %v341
    %v540 = vunpack.c.l.b16 %v342
    %v541 = vunpack.c.l.b16 %v343
    %v542 = vunpack.c.l.b16 %v344
    %v543 = vunpack.c.l.b16 %v345
    %v544 = vunpack.c.l.b16 %v346
    %v545 = vunpack.c.l.b16 %v347
    %v546 = vunpack.c.l.b16 %v348
    %v547 = vunpack.c.l.b16 %v349
    %v548 = vunpack.c.l.b16 %v350
    %v549 = vunpack.c.l.b16 %v351
    %v550 = vunpack.c.l.b16 %v352
    %v551 = vunpack.c.l.b16 %v353
    %v552 = vunpack.c.l.b16 %v354
    %v553 = vunpack.c.l.b16 %v355
    %v554 = vunpack.c.l.b16 %v356
    %v555 = vunpack.c.l.b16 %v357
    %v556 = vunpack.c.l.b16 %v358
    %v557 = vunpack.c.l.b16 %v359
    %v558 = vunpack.c.l.b16 %v360
    %v559 = vunpack.c.l.b16 %v361
    %v560 = vunpack.c.l.b16 %v362
    %v561 = vunpack.c.l.b16 %v363
    %v562 = vunpack.c.l.b16 %v364
    %v563 = vunpack.c.l.b16 %v365
    %v564 = vunpack.c.l.b16 %v366
    %v565 = vunpack.c.l.b16 %v367
    %v566 = vunpack.c.l.b16 %v368
    %v567 = vunpack.c.l.b16 %v369
    %v568 = vunpack.c.l.b16 %v370
    %v569 = vunpack.c.l.b16 %v371
    %v570 = vunpack.c.l.b16 %v372
    %v571 = vunpack.c.l.b16 %v373
    %v572 = vunpack.c.l.b16 %v374
    %v573 = vunpack.c.l.b16 %v375
    %v574 = vunpack.c.l.b16 %v376
    %v575 = vunpack.c.l.b16 %v377
    %v576 = vunpack.c.l.b16 %v378
    %v577 = vunpack.c.l.b16 %v379
    %v578 = vunpack.c.l.b16 %v380
    %v579 = vunpack.c.l.b16 %v381
    %v580 = vunpack.c.l.b16 %v382
    %v581 = vunpack.c.l.b16 %v383
    %v582 = vunpack.c.l.b16 %v384
    %v583 = vunpack.c.l.b16 %v385
    %v584 = vunpack.c.l.b16 %v386
    %v585 = vunpack.c.l.b16 %v387
    %v586 = vunpack.c.l.b16 %v388
    %v587 = vunpack.c.l.b16 %v389
    %v588 = vunpack.c.l.b16 %v390
    %v589 = vunpack.c.l.b16 %v391
    %v590 = vunpack.c.l.b16 %v392
    %v591 = vunpack.c.l.b16 %v393
    %v592 = vunpack.c.l.b16 %v394
    %v593 = vunpack.c.l.b16 %v395
    %v594 = vunpack.c.l.b16 %v396
    %v595 = vunpack.c.l.b16 %v397
    %v596 = vunpack.c.l.b16 %v398
    %v597 = vunpack.c.l.b16 %v399
    %v598 = vunpack.c.l.b16 %v400
    %v599 = vunpack.c.l.b16 %v401
    %v600 = vunpack.c.l.b16 %v402
    %v601 = vpack.c.b16 %v506, %v505
    %v602 = vpack.c.b16 %v508, %v507
    %v603 = vpack.c.b16 %v510, %v509
    %v604 = vpack.c.b16 %v512, %v511
    %v605 = vpack.c.b16 %v514, %v513
    %v606 = vpack.c.b16 %v516, %v515
    %v607 = vpack.c.b16 %v518, %v517
    %v608 = vpack.c.b16 %v520, %v519
    %v609 = vpack.c.b16 %v522, %v521
    %v610 = vpack.c.b16 %v524, %v523
    %v611 = vpack.c.b16 %v526, %v525
    %v612 = vpack.c.b16 %v528, %v527
    %v613 = vpack.c.b16 %v530, %v529
    %v614 = vpack.c.b16 %v532, %v531
    %v615 = vpack.c.b16 %v534, %v533
    %v616 = vpack.c.b16 %v536, %v535
    %v617 = vpack.c.b16 %v538, %v537
    %v618 = vpack.c.b16 %v540, %v539
    %v619 = vpack.c.b16 %v542, %v541
    %v620 = vpack.c.b16 %v544, %v543
    %v621 = vpack.c.b16 %v546, %v545
    %v622 = vpack.c.b16 %v548, %v547
    %v623 = vpack.c.b16 %v550, %v549
    %v624 = vpack.c.b16 %v552, %v551
    %v625 = vpack.c.b16 %v554, %v553
    %v626 = vpack.c.b16 %v556, %v555
    %v627 = vpack.c.b16 %v558, %v557
    %v628 = vpack.c.b16 %v560, %v559
    %v629 = vpack.c.b16 %v562, %v561
    %v630 = vpack.c.b16 %v564, %v563
    %v631 = vpack.c.b16 %v566, %v565
    %v632 = vpack.c.b16 %v568, %v567
    %v633 = vpack.c.b16 %v570, %v569
    %v634 = vpack.c.b16 %v572, %v571
    %v635 = vpack.c.b16 %v574, %v573
    %v636 = vpack.c.b16 %v576, %v575
    %v637 = vpack.c.b16 %v578, %v577
    %v638 = vpack.c.b16 %v580, %v579
    %v639 = vpack.c.b16 %v582, %v581
    %v640 = vpack.c.b16 %v584, %v583
    %v641 = vpack.c.b16 %v586, %v585
    %v642 = vpack.c.b16 %v588, %v587
    %v643 = vpack.c.b16 %v590, %v589
    %v644 = vpack.c.b16 %v592, %v591
    %v645 = vpack.c.b16 %v594, %v593
    %v646 = vpack.c.b16 %v596, %v595
    %v647 = vpack.c.b16 %v598, %v597
    %v648 = vpack.c.b16 %v600, %v599
    %697 = vmatprep.subr.bf16.mxu0 0
    %698 = vmatpush1.bf16.msra.mxu0 %v601
    %699 = vmatprep.subr.bf16.mxu0 0
    %700 = vmatpush1.bf16.msra.mxu0 %v602
    %701 = vmatprep.subr.bf16.mxu0 0
    %702 = vmatpush1.bf16.msra.mxu0 %v603
    %703 = vmatprep.subr.bf16.mxu0 0
    %704 = vmatpush1.bf16.msra.mxu0 %v604
    %705 = vmatprep.subr.bf16.mxu0 0
    %706 = vmatpush1.bf16.msra.mxu0 %v605
    %707 = vmatprep.subr.bf16.mxu0 0
    %708 = vmatpush1.bf16.msra.mxu0 %v606
    %709 = vmatprep.subr.bf16.mxu0 0
    %710 = vmatpush1.bf16.msra.mxu0 %v607
    %711 = vmatprep.subr.bf16.mxu0 0
    %712 = vmatpush1.bf16.msra.mxu0 %v608
    %713 = vmatprep.subr.bf16.mxu0 0
    %714 = vmatpush1.bf16.msra.mxu0 %v609
    %715 = vmatprep.subr.bf16.mxu0 0
    %716 = vmatpush1.bf16.msra.mxu0 %v610
    %717 = vmatprep.subr.bf16.mxu0 0
    %718 = vmatpush1.bf16.msra.mxu0 %v611
    %719 = vmatprep.subr.bf16.mxu0 0
    %720 = vmatpush1.bf16.msra.mxu0 %v612
    %721 = vmatprep.subr.bf16.mxu0 0
    %722 = vmatpush1.bf16.msra.mxu0 %v613
    %723 = vmatprep.subr.bf16.mxu0 0
    %724 = vmatpush1.bf16.msra.mxu0 %v614
    %725 = vmatprep.subr.bf16.mxu0 0
    %726 = vmatpush1.bf16.msra.mxu0 %v615
    %727 = vmatprep.subr.bf16.mxu0 0
    %728 = vmatpush1.bf16.msra.mxu0 %v616
    %729 = vmatprep.mubr.bf16.mxu0 %v302
    %730 = vmatmul.mubr.bf16.gmra.mrb[0].mxu0 %v301
    %v731 = vpop.f32.mrb[0].mxu0
    %v732 = vadd.f32 %v407, %v731
    %v733 = vpop.f32.mrb[0].mxu0
    %v734 = vpop.f32.mrb[0].mxu0
    %v735 = vpop.f32.mrb[0].mxu0
    %736 = vdwg.mxu0
    %737 = vmatprep.subr.bf16.mxu0 0
    %738 = vmatpush1.bf16.msra.mxu0 %v617
    %739 = vmatprep.subr.bf16.mxu0 0
    %740 = vmatpush1.bf16.msra.mxu0 %v618
    %741 = vmatprep.subr.bf16.mxu0 0
    %742 = vmatpush1.bf16.msra.mxu0 %v619
    %743 = vmatprep.subr.bf16.mxu0 0
    %744 = vmatpush1.bf16.msra.mxu0 %v620
    %745 = vmatprep.subr.bf16.mxu0 0
    %746 = vmatpush1.bf16.msra.mxu0 %v621
    %747 = vmatprep.subr.bf16.mxu0 0
    %748 = vmatpush1.bf16.msra.mxu0 %v622
    %749 = vmatprep.subr.bf16.mxu0 0
    %750 = vmatpush1.bf16.msra.mxu0 %v623
    %751 = vmatprep.subr.bf16.mxu0 0
    %752 = vmatpush1.bf16.msra.mxu0 %v624
    %753 = vmatprep.subr.bf16.mxu0 0
    %754 = vmatpush1.bf16.msra.mxu0 %v625
    %755 = vmatprep.subr.bf16.mxu0 0
    %756 = vmatpush1.bf16.msra.mxu0 %v626
    %757 = vmatprep.subr.bf16.mxu0 0
    %758 = vmatpush1.bf16.msra.mxu0 %v627
    %759 = vmatprep.subr.bf16.mxu0 0
    %760 = vmatpush1.bf16.msra.mxu0 %v628
    %761 = vmatprep.subr.bf16.mxu0 0
    %762 = vmatpush1.bf16.msra.mxu0 %v629
    %763 = vmatprep.subr.bf16.mxu0 0
    %764 = vmatpush1.bf16.msra.mxu0 %v630
    %765 = vmatprep.subr.bf16.mxu0 0
    %766 = vmatpush1.bf16.msra.mxu0 %v631
    %767 = vmatprep.subr.bf16.mxu0 0
    %768 = vmatpush1.bf16.msra.mxu0 %v632
    %769 = vmatprep.mubr.bf16.mxu0 %v304
    %770 = vmatmul.mubr.bf16.gmra.mrb[0].mxu0 %v303
    %v771 = vpop.f32.mrb[0].mxu0
    %v772 = vadd.f32 %v732, %v771
    %v773 = vpop.f32.mrb[0].mxu0
    %v774 = vpop.f32.mrb[0].mxu0
    %v775 = vpop.f32.mrb[0].mxu0
    %776 = vdwg.mxu0
    %777 = vmatprep.subr.bf16.mxu0 0
    %778 = vmatpush1.bf16.msra.mxu0 %v633
    %779 = vmatprep.subr.bf16.mxu0 0
    %780 = vmatpush1.bf16.msra.mxu0 %v634
    %781 = vmatprep.subr.bf16.mxu0 0
    %782 = vmatpush1.bf16.msra.mxu0 %v635
    %783 = vmatprep.subr.bf16.mxu0 0
    %784 = vmatpush1.bf16.msra.mxu0 %v636
    %785 = vmatprep.subr.bf16.mxu0 0
    %786 = vmatpush1.bf16.msra.mxu0 %v637
    %787 = vmatprep.subr.bf16.mxu0 0
    %788 = vmatpush1.bf16.msra.mxu0 %v638
    %789 = vmatprep.subr.bf16.mxu0 0
    %790 = vmatpush1.bf16.msra.mxu0 %v639
    %791 = vmatprep.subr.bf16.mxu0 0
    %792 = vmatpush1.bf16.msra.mxu0 %v640
    %793 = vmatprep.subr.bf16.mxu0 0
    %794 = vmatpush1.bf16.msra.mxu0 %v641
    %795 = vmatprep.subr.bf16.mxu0 0
    %796 = vmatpush1.bf16.msra.mxu0 %v642
    %797 = vmatprep.subr.bf16.mxu0 0
    %798 = vmatpush1.bf16.msra.mxu0 %v643
    %799 = vmatprep.subr.bf16.mxu0 0
    %800 = vmatpush1.bf16.msra.mxu0 %v644
    %801 = vmatprep.subr.bf16.mxu0 0
    %802 = vmatpush1.bf16.msra.mxu0 %v645
    %803 = vmatprep.subr.bf16.mxu0 0
    %804 = vmatpush1.bf16.msra.mxu0 %v646
    %805 = vmatprep.subr.bf16.mxu0 0
    %806 = vmatpush1.bf16.msra.mxu0 %v647
    %807 = vmatprep.subr.bf16.mxu0 0
    %808 = vmatpush1.bf16.msra.mxu0 %v648
    %809 = vmatprep.mubr.bf16.mxu0 %v306
    %810 = vmatmul.mubr.bf16.gmra.mrb[0].mxu0 %v305
    %v811 = vpop.f32.mrb[0].mxu0
    %v812 = vadd.f32 %v772, %v811
    %v813 = vpop.f32.mrb[0].mxu0
    %v814 = vpop.f32.mrb[0].mxu0
    %v815 = vpop.f32.mrb[0].mxu0
    %816 = vdwg.mxu0
    %v817 = vmax.f32 %v812, 0.0
    %818 = vst [vmem:[#allocation8] sm:$0xff] %v817
    // Predicated region
    $region34: #{tpu_custom_call.1} parent=1 // pred_check
      _
    $region35: #{tpu_custom_call.1} parent=1 // pred_check_branch
      %820 = sbr.rel (0) target = $region37
    $region36: #{tpu_custom_call.1} parent=1 // pred_region
      %s822 = ssub.s32 128, 128
      %823 = vsyncadd [#allocation4], %s822
      %s825 = sshll.u32 [#allocation8], 4
      %s826 = int_to_ptr.vmem [resolvable:$true] %s825
      %828 = dma.vmem_to_hbm [thread:$0]  %s826, 128, %s5, [#allocation4]
    $region37: #{tpu_custom_call.1} parent=1 // pred_fallthru
      _
    // Predicated region
    $region38: #{tpu_custom_call.1} parent=1 // pred_check
      _
    $region39: #{tpu_custom_call.1} parent=1 // pred_check_branch
      %830 = sbr.rel (0) target = $region41
    $region40: #{tpu_custom_call.1} parent=1 // pred_region
      %831 = dma.done [#allocation4], 128
    $region41: #{tpu_custom_call.1} parent=1 // pred_fallthru
      _
    %832 = vsyncpa [#allocation3], 1
    %833 = vsyncpa [#allocation6], 1
    %834 = vsyncpa [#allocation4], 1

</llo_original>
